<compile_context>
chip_gen: v5e
topology: v5e:2x2
jax: 0.10.0
libtpu: 0.0.40
codegen_flags: <defaults>
</compile_context>

<pallas_src>
import jax
import jax.numpy as jnp
import numpy as np
from jax.experimental import pallas as pl
from jax.experimental.pallas import tpu as pltpu


def edge_block_kernel(recv_ref, send_ref, edges_ref, a_ref, out_ref):
    recv = recv_ref[...]          # (1, tE)  int32, receiver index (lane-dense)
    send = send_ref[...]          # (1, tE)  int32, sender index + N (pre-offset)
    e_rows = edges_ref[...]       # (tE, D)  row-major edge tile (as stored in HBM)
    a = a_ref[...]                # (D, D+2N) fused weight [W_e | W_r@nodes.T | W_s@nodes.T]

    d = a.shape[0]
    two_n = a.shape[1] - d
    t_e = e_rows.shape[0]

    # Feature-major edge tile via in-kernel XLU transpose (no wrapper relayout,
    # keeps the output lane-dense with tE >= 128 -> unmasked vst).
    e_t = e_rows.T                                                 # (D, tE)

    # Fused receiver/sender one-hot, shape (2N, tE):
    #   row j == recv      for j <  N
    #   row j == send + N  for j >= N   (offset already added in the wrapper)
    # TODO(synk): for large N switch to a scalar-prefetched / DMA gather of the
    # pre-projected node rows instead of this O(N) one-hot matmul.
    row = jax.lax.broadcasted_iota(jnp.int32, (two_n, t_e), 0)
    onehot = ((row == recv) | (row == send)).astype(e_t.dtype)     # (2N, tE)

    # Single MXU pass:  out_T = A @ [e_T ; onehot],  K = D + 2N.
    x = jnp.concatenate([e_t, onehot], axis=0)                     # (D+2N, tE)
    out_ref[...] = jnp.dot(a, x, preferred_element_type=jnp.float32).astype(out_ref.dtype)


def _auto_tile_e(E, D, itemsize, vmem_budget_bytes=8 << 20, max_tile=2048):
    """Lane-dense tile pick: >=2 grid steps when possible (v7x has 2 TCs), tiles a
    multiple of 128 lanes, capped so double-buffered in+out tiles stay well inside
    even v7x's 64 MiB physical / 32 MiB default-scoped VMEM."""
    if E <= 128:
        return E                                    # single full-extent block
    tile = ((pl.cdiv(E, 2) + 127) // 128) * 128     # aim for 2 balanced steps
    max_by_vmem = max(128, ((vmem_budget_bytes // (4 * max(D, 1) * itemsize)) // 128) * 128)
    return int(min(tile, max_tile, max_by_vmem))


def edge_block_forward(edges, nodes, receivers, senders, w, *,
                       tile_e=None, use_bf16=False, row_major_output=False):
    """EdgeBlock forward (identity update_fn).

    edges:     (E, D) float32     nodes: (N, D) float32
    receivers: (E,)   int         senders: (E,) int
    w:         (D, 3D) nn.Linear(3D, D, bias=False) weight (PyTorch layout)

    Returns (updated_edges, None). By default updated_edges is feature-major
    (D, E) so downstream consumers avoid an extra HBM relayout; pass
    row_major_output=True for the PyTorch (E, D) layout.
    """
    E, D = edges.shape
    N = nodes.shape[0]

    w_e = w[:, :D]            # (D, D)
    w_r = w[:, D:2 * D]       # (D, D)
    w_s = w[:, 2 * D:]        # (D, D)

    # Fused resident weight: A = [W_e | W_r @ nodes.T | W_s @ nodes.T]  (D, D+2N).
    # Node projections are O(N*D*D), done once outside the per-edge loop.
    a_fused = jnp.concatenate([w_e, w_r @ nodes.T, w_s @ nodes.T], axis=1)

    edges_in = edges
    if use_bf16:
        # bf16 MXU inputs with f32 accumulation: halves HBM traffic on the edge
        # stream (v6e/v7x native-bf16 MXU; also legal on v5e). rtol ~1e-2.
        edges_in = edges_in.astype(jnp.bfloat16)
        a_fused = a_fused.astype(jnp.bfloat16)

    recv2d = receivers.reshape(1, E).astype(jnp.int32)           # (1, E) lane-dense
    send2d = (senders.astype(jnp.int32) + N).reshape(1, E)       # pre-offset by N

    itemsize = jnp.dtype(edges_in.dtype).itemsize
    if tile_e is None:
        tile_e = _auto_tile_e(E, D, itemsize)
    grid_e = pl.cdiv(E, tile_e)

    k_dim = D + 2 * N
    cost = pl.CostEstimate(
        flops=2 * E * k_dim * D,
        transcendentals=0,
        bytes_accessed=itemsize * E * D            # edges in
        + 4 * E * D                                # output
        + 4 * 2 * E                                # indices
        + itemsize * D * k_dim,                    # fused weight (resident)
    )

    out_t = pl.pallas_call(
        edge_block_kernel,
        out_shape=jax.ShapeDtypeStruct((D, E), edges.dtype),
        grid_spec=pltpu.PrefetchScalarGridSpec(
            num_scalar_prefetch=0,
            grid=(grid_e,),
            in_specs=[
                pl.BlockSpec((1, tile_e), lambda i: (0, i)),     # receivers
                pl.BlockSpec((1, tile_e), lambda i: (0, i)),     # senders (+N)
                pl.BlockSpec((tile_e, D), lambda i: (i, 0)),     # edges, row-major
                pl.BlockSpec((D, k_dim), lambda i: (0, 0)),      # fused weight (resident)
            ],
            out_specs=pl.BlockSpec((D, tile_e), lambda i: (0, i)),
        ),
        compiler_params=pltpu.CompilerParams(
            dimension_semantics=("parallel",)),
        cost_estimate=cost,
    )(recv2d, send2d, edges_in, a_fused)

    if row_major_output:
        return out_t.T, None
    return out_t, None  # feature-major (D, E), attn_edges=None


if __name__ == "__main__":
    d_model = 32          # D
    num_nodes = 16        # N
    num_edges = 256       # E
    d_in = 3 * d_model    # use_edges + use_receiver_nodes + use_sender_nodes

    key = jax.random.PRNGKey(0)
    k_e, k_n, k_w, k_r, k_s = jax.random.split(key, 5)

    edges = jax.random.normal(k_e, (num_edges, d_model), dtype=jnp.float32)
    nodes = jax.random.normal(k_n, (num_nodes, d_model), dtype=jnp.float32)
    receivers = jax.random.randint(k_r, (num_edges,), 0, num_nodes, dtype=jnp.int32)
    senders = jax.random.randint(k_s, (num_edges,), 0, num_nodes, dtype=jnp.int32)

    # nn.Linear(d_in, d_model, bias=False): weight shape (d_model, d_in)
    w = jax.random.normal(k_w, (d_model, d_in), dtype=jnp.float32) * (1.0 / np.sqrt(d_in))

    updated_edges_t, attn_edges = edge_block_forward(edges, nodes, receivers, senders, w)
    updated_edges_t = jax.block_until_ready(updated_edges_t)

    # Pure-JAX reference of the exact PyTorch semantics (identity update_fn).
    collected_ref = jnp.concatenate(
        [edges, nodes[receivers], nodes[senders]], axis=-1)
    ref = collected_ref @ w.T                                   # (E, D)

    # Kernel output is feature-major (D, E); compare against ref.T.
    np.testing.assert_allclose(np.asarray(updated_edges_t), np.asarray(ref).T,
                               rtol=1e-4, atol=1e-4)
    print("KERNEL_OK")
</pallas_src>

<mosaic_0001>
module attributes {stable_mosaic.version = 11 : i64} {
  func.func @edge_block_kernel(%arg0: i32, %arg1: memref<1x128xi32, #tpu.memory_space<vmem>>, %arg2: memref<1x128xi32, #tpu.memory_space<vmem>>, %arg3: memref<128x32xf32, #tpu.memory_space<vmem>>, %arg4: memref<32x64xf32, #tpu.memory_space<vmem>>, %arg5: memref<32x128xf32, #tpu.memory_space<vmem>>) attributes {dimension_semantics = [#tpu.dimension_semantics<parallel>], iteration_bounds = array<i64: 2>, scalar_prefetch = 0 : i64, scratch_operands = 0 : i64, tpu.core_type = #tpu.core_type<tc>, window_params = [{transform_indices = @transform_0, window_bounds = array<i64: 1, 128>}, {transform_indices = @transform_1, window_bounds = array<i64: 1, 128>}, {transform_indices = @transform_2, window_bounds = array<i64: 128, 32>}, {pipeline_mode = #tpu.pipeline_mode<synchronous>, transform_indices = @transform_3, window_bounds = array<i64: 32, 64>}, {transform_indices = @transform_4, window_bounds = array<i64: 32, 128>}]} {
    %c0 = arith.constant 0 : index
    %c0_0 = arith.constant 0 : index
    %0 = vector.load %arg1[%c0, %c0_0] : memref<1x128xi32, #tpu.memory_space<vmem>>, vector<1x128xi32>
    %c0_1 = arith.constant 0 : index
    %c0_2 = arith.constant 0 : index
    %1 = vector.load %arg2[%c0_1, %c0_2] : memref<1x128xi32, #tpu.memory_space<vmem>>, vector<1x128xi32>
    %c0_3 = arith.constant 0 : index
    %c0_4 = arith.constant 0 : index
    %2 = vector.load %arg3[%c0_3, %c0_4] : memref<128x32xf32, #tpu.memory_space<vmem>>, vector<128x32xf32>
    %c0_5 = arith.constant 0 : index
    %c0_6 = arith.constant 0 : index
    %3 = vector.load %arg4[%c0_5, %c0_6] : memref<32x64xf32, #tpu.memory_space<vmem>>, vector<32x64xf32>
    %4 = tpu.transpose %2, [1, 0] : vector<128x32xf32> -> vector<32x128xf32>
    %5 = tpu.iota {dimensions = array<i32: 0>} : vector<32x128xi32>
    %6 = vector.broadcast %0 : vector<1x128xi32> to vector<32x128xi32>
    %7 = arith.cmpi eq, %5, %6 : vector<32x128xi32>
    %8 = vector.broadcast %1 : vector<1x128xi32> to vector<32x128xi32>
    %9 = arith.cmpi eq, %5, %8 : vector<32x128xi32>
    %10 = arith.ori %7, %9 : vector<32x128xi1>
    %11 = arith.extui %10 : vector<32x128xi1> to vector<32x128xi32>
    %12 = arith.sitofp %11 : vector<32x128xi32> to vector<32x128xf32>
    %13 = tpu.concatenate %4, %12 in 0 : vector<32x128xf32>, vector<32x128xf32> -> vector<64x128xf32>
    %cst = arith.constant dense<0.000000e+00> : vector<32x128xf32>
    %14 = tpu.matmul %3, %13, %cst {dimension_numbers = #tpu.dot_dimension_numbers<[1], [0], [0], [1], [0, 0, 1, 1], [], []>} : vector<32x64xf32>, vector<64x128xf32>, vector<32x128xf32> -> vector<32x128xf32>
    %c0_7 = arith.constant 0 : index
    %c0_8 = arith.constant 0 : index
    %15 = vector.load %arg5[%c0_7, %c0_8] : memref<32x128xf32, #tpu.memory_space<vmem>>, vector<32x128xf32>
    tpu.vector_store %arg5[%c0_7, %c0_8], %14 {strides = array<i32>} : memref<32x128xf32, #tpu.memory_space<vmem>>, vector<32x128xf32>,
    return
  }
  func.func @transform_0(%arg0: i32) -> (i32, i32) {
    %c0_i32 = arith.constant 0 : i32
    %c0_i32_0 = arith.constant 0 : i32
    return %c0_i32, %arg0 : i32, i32
  }
  func.func @transform_1(%arg0: i32) -> (i32, i32) {
    %c0_i32 = arith.constant 0 : i32
    %c0_i32_0 = arith.constant 0 : i32
    return %c0_i32, %arg0 : i32, i32
  }
  func.func @transform_2(%arg0: i32) -> (i32, i32) {
    %c0_i32 = arith.constant 0 : i32
    %c0_i32_0 = arith.constant 0 : i32
    return %arg0, %c0_i32 : i32, i32
  }
  func.func @transform_3(%arg0: i32) -> (i32, i32) {
    %c0_i32 = arith.constant 0 : i32
    %c0_i32_0 = arith.constant 0 : i32
    %c0_i32_1 = arith.constant 0 : i32
    return %c0_i32, %c0_i32_0 : i32, i32
  }
  func.func @transform_4(%arg0: i32) -> (i32, i32) {
    %c0_i32 = arith.constant 0 : i32
    %c0_i32_0 = arith.constant 0 : i32
    return %c0_i32, %arg0 : i32, i32
  }
}

</mosaic_0001>

<llo_original>
// kernel: tpu_custom_call.1
$region0: #{tpu_custom_call.1}
  #allocation0 [shape = 'u32[]', space=smem, size = 0x4, offset = 0x4, fixed_abs, tag = 'smem constant byte address 0x4 - core index']
  #allocation1 [shape = 'u32[72,128]{1,0:T(1,128)}', space=vmem, size = 0x9000, scoped, tag = 'internal scratch']
  %s0 = inlined_call_operand.vmem [shape: s32[1,256], index: 0, kind: input, shape index: {}]
  %s1 = inlined_call_operand.vmem [shape: s32[1,256], index: 1, kind: input, shape index: {}]
  %s2 = inlined_call_operand.vmem [shape: f32[256,32], index: 2, kind: input, shape index: {}]
  %s3 = inlined_call_operand.vmem [shape: f32[32,64], index: 3, kind: input, shape index: {}]
  %s4 = inlined_call_operand.hbm [shape: f32[32,256], index: 4, kind: output, shape index: {}]
  %s5 = sld [smem:[#allocation0]]
  $region49: #{tpu_custom_call.1} parent=0
    _
  %s7 = ssub.s32 1, %s5
  %s8 = scalar_select 0, %s7, %s5
  $region1: #{tpu_custom_call.1} parent=0
    #allocation2 [shape = 'u8[32768]{0}', space=vmem, size = 0x8000, scoped, tag = 'output window, operand 0']
    #allocation3 [shape = 's32[2]{0}', space=sflag, size = 0x8, scoped, tag = 'scoped memory for tpu_custom_call.1']
    %9 = vsyncpa [#allocation3], 0
    %s10 = scalar_lea.sflag [#allocation3], 1
    %11 = vsyncpa %s10, 0
    loop: start=0, step=1, limit=4
    $region2: #{tpu_custom_call.1} parent=1 // loop_pre_header
      _
    $region3: #{tpu_custom_call.1} parent=1 // loop_header
      %s13 = sphi 0, %s17
      %p14 = scmp.ge.s32.totalorder %s13, 4
      %s23 = sphi 0, %s25
      %s26 = sphi 0, %s23
      %s27 = sphi 0, %s26
      %s43 = sphi 0, %s27
      %s49 = sphi 0, %s51
      %s52 = sphi 0, %s49
      %s53 = sphi 0, %s52
      %s69 = sphi 0, %s53
      %s75 = sphi 0, %s77
      %s78 = sphi 0, %s75
      %s79 = sphi 0, %s78
      %s95 = sphi 0, %s79
      %s99 = sphi 0, %s99
      %s101 = sphi 0, %s99
      %s102 = sphi 0, %s101
      %s116 = sphi 0, %s102
      %s122 = sphi 0, %s124
      %s125 = sphi 0, %s122
      %s126 = sphi 0, %s125
      %s142 = sphi 0, %s126
    $region4: #{tpu_custom_call.1} parent=1 // loop_header_branch
      %16 = sbr.rel (%p14) target = $region8
    $region5: #{tpu_custom_call.1} parent=1 // loop_body
      %s18 = ssub.s32 %s13, 1
      %s19 = ssub.s32 %s13, 2
      %s20 = sadd.s32 %s13, 1
      %s21 = ssub.s32 %s13, %s20
      %p22 = scmp.eq.s32.totalorder %s21, 0
      %s24 = sadd.s32 %s23, 1
      %s25 = scalar_select %p22, %s23, %s24
      %p28 = pneg %p22
      %p29 = scmp.eq.s32.totalorder %s13, 1
      %p30 = por %p28, %p29
      %p31 = scmp.ne.s32.totalorder %s23, %s26
      %p32 = scmp.eq.s32.totalorder %s13, 0
      %p33 = por %p31, %p32
      %p34 = scmp.ne.s32.totalorder %s23, %s26
      %p35 = scmp.eq.s32.totalorder %s18, 1
      %p36 = por %p34, %p35
      %p37 = scmp.ne.s32.totalorder %s26, %s27
      %p38 = scmp.eq.s32.totalorder %s18, 0
      %p39 = por %p37, %p38
      %p40 = scmp.ne.s32.totalorder %s26, %s27
      %p41 = scmp.eq.s32.totalorder %s19, 1
      %p42 = por %p40, %p41
      %p44 = scmp.ne.s32.totalorder %s27, %s43
      %p45 = scmp.eq.s32.totalorder %s19, 0
      %p46 = por %p44, %p45
      %s47 = ssub.s32 %s13, %s20
      %p48 = scmp.eq.s32.totalorder %s47, 0
      %s50 = sadd.s32 %s49, 1
      %s51 = scalar_select %p48, %s49, %s50
      %p54 = pneg %p48
      %p55 = scmp.eq.s32.totalorder %s13, 1
      %p56 = por %p54, %p55
      %p57 = scmp.ne.s32.totalorder %s49, %s52
      %p58 = scmp.eq.s32.totalorder %s13, 0
      %p59 = por %p57, %p58
      %p60 = scmp.ne.s32.totalorder %s49, %s52
      %p61 = scmp.eq.s32.totalorder %s18, 1
      %p62 = por %p60, %p61
      %p63 = scmp.ne.s32.totalorder %s52, %s53
      %p64 = scmp.eq.s32.totalorder %s18, 0
      %p65 = por %p63, %p64
      %p66 = scmp.ne.s32.totalorder %s52, %s53
      %p67 = scmp.eq.s32.totalorder %s19, 1
      %p68 = por %p66, %p67
      %p70 = scmp.ne.s32.totalorder %s53, %s69
      %p71 = scmp.eq.s32.totalorder %s19, 0
      %p72 = por %p70, %p71
      %s73 = ssub.s32 %s13, %s20
      %p74 = scmp.eq.s32.totalorder %s73, 0
      %s76 = sadd.s32 %s75, 1
      %s77 = scalar_select %p74, %s75, %s76
      %p80 = pneg %p74
      %p81 = scmp.eq.s32.totalorder %s13, 1
      %p82 = por %p80, %p81
      %p83 = scmp.ne.s32.totalorder %s75, %s78
      %p84 = scmp.eq.s32.totalorder %s13, 0
      %p85 = por %p83, %p84
      %p86 = scmp.ne.s32.totalorder %s75, %s78
      %p87 = scmp.eq.s32.totalorder %s18, 1
      %p88 = por %p86, %p87
      %p89 = scmp.ne.s32.totalorder %s78, %s79
      %p90 = scmp.eq.s32.totalorder %s18, 0
      %p91 = por %p89, %p90
      %p92 = scmp.ne.s32.totalorder %s78, %s79
      %p93 = scmp.eq.s32.totalorder %s19, 1
      %p94 = por %p92, %p93
      %p96 = scmp.ne.s32.totalorder %s79, %s95
      %p97 = scmp.eq.s32.totalorder %s19, 0
      %p98 = por %p96, %p97
      %s100 = sadd.s32 %s99, 1
      %p103 = scmp.eq.s32.totalorder %s13, 1
      %p104 = scmp.ne.s32.totalorder %s99, %s101
      %p105 = scmp.eq.s32.totalorder %s13, 0
      %p106 = por %p104, %p105
      %p107 = scmp.ne.s32.totalorder %s99, %s101
      %p108 = scmp.eq.s32.totalorder %s18, 1
      %p109 = por %p107, %p108
      %p110 = scmp.ne.s32.totalorder %s101, %s102
      %p111 = scmp.eq.s32.totalorder %s18, 0
      %p112 = por %p110, %p111
      %p113 = scmp.ne.s32.totalorder %s101, %s102
      %p114 = scmp.eq.s32.totalorder %s19, 1
      %p115 = por %p113, %p114
      %p117 = scmp.ne.s32.totalorder %s102, %s116
      %p118 = scmp.eq.s32.totalorder %s19, 0
      %p119 = por %p117, %p118
      %s120 = ssub.s32 %s13, %s20
      %p121 = scmp.eq.s32.totalorder %s120, 0
      %s123 = sadd.s32 %s122, 1
      %s124 = scalar_select %p121, %s122, %s123
      %p127 = pneg %p121
      %p128 = scmp.eq.s32.totalorder %s13, 1
      %p129 = por %p127, %p128
      %p130 = scmp.ne.s32.totalorder %s122, %s125
      %p131 = scmp.eq.s32.totalorder %s13, 0
      %p132 = por %p130, %p131
      %p133 = scmp.ne.s32.totalorder %s122, %s125
      %p134 = scmp.eq.s32.totalorder %s18, 1
      %p135 = por %p133, %p134
      %p136 = scmp.ne.s32.totalorder %s125, %s126
      %p137 = scmp.eq.s32.totalorder %s18, 0
      %p138 = por %p136, %p137
      %p139 = scmp.ne.s32.totalorder %s125, %s126
      %p140 = scmp.eq.s32.totalorder %s19, 1
      %p141 = por %p139, %p140
      %p143 = scmp.ne.s32.totalorder %s126, %s142
      %p144 = scmp.eq.s32.totalorder %s19, 0
      %p145 = por %p143, %p144
      %p146 = scmp.le.s32.totalorder 1, %s13
      %p147 = scmp.lt.s32.totalorder %s13, 3
      %p148 = pnand %p146, %p147
      %p149 = pneg %p148
      // Predicated region
      $region9: #{tpu_custom_call.1} parent=5 // pred_check
        _
      $region10: #{tpu_custom_call.1} parent=5 // pred_check_branch
        %151 = sbr.rel (%p148) target = $region12
      $region11: #{tpu_custom_call.1} parent=5 // pred_region
        %s152 = ssub.s32 %s13, 1
        // Predicated region
        $region13: #{tpu_custom_call.1} parent=11 // pred_check
          %p153 = pneg %p112
        $region14: #{tpu_custom_call.1} parent=11 // pred_check_branch
          %155 = sbr.rel (%p153) target = $region16
        $region15: #{tpu_custom_call.1} parent=11 // pred_region
          _
        $region16: #{tpu_custom_call.1} parent=11 // pred_fallthru
          _
      $region12: #{tpu_custom_call.1} parent=5 // pred_fallthru
        _
      %p156 = scmp.lt.s32.totalorder %s13, 2
      // Predicated region
      $region17: #{tpu_custom_call.1} parent=5 // pred_check
        %p157 = pneg %p156
      $region18: #{tpu_custom_call.1} parent=5 // pred_check_branch
        %159 = sbr.rel (%p157) target = $region20
      $region19: #{tpu_custom_call.1} parent=5 // pred_region
        // Predicated region
        $region21: #{tpu_custom_call.1} parent=19 // pred_check
          %p160 = pneg %p33
        $region22: #{tpu_custom_call.1} parent=19 // pred_check_branch
          %162 = sbr.rel (%p160) target = $region24
        $region23: #{tpu_custom_call.1} parent=19 // pred_region
          %p163 = scmp.lt.s32.totalorder %s13, 1
          %s164 = scalar_select %p163, %s13, 1
          %s165 = scalar_lea.vmem %s0, %s164
        $region24: #{tpu_custom_call.1} parent=19 // pred_fallthru
          _
        // Predicated region
        $region25: #{tpu_custom_call.1} parent=19 // pred_check
          %p166 = pneg %p59
        $region26: #{tpu_custom_call.1} parent=19 // pred_check_branch
          %168 = sbr.rel (%p166) target = $region28
        $region27: #{tpu_custom_call.1} parent=19 // pred_region
          %p169 = scmp.lt.s32.totalorder %s13, 1
          %s170 = scalar_select %p169, %s13, 1
          %s171 = scalar_lea.vmem %s1, %s170
        $region28: #{tpu_custom_call.1} parent=19 // pred_fallthru
          _
        // Predicated region
        $region29: #{tpu_custom_call.1} parent=19 // pred_check
          %p172 = pneg %p85
        $region30: #{tpu_custom_call.1} parent=19 // pred_check_branch
          %174 = sbr.rel (%p172) target = $region32
        $region31: #{tpu_custom_call.1} parent=19 // pred_region
          %s175 = smul.u32 16, %s13
          %p176 = scmp.lt.s32.totalorder %s175, 31
          %s177 = scalar_select %p176, %s175, 31
          %s178 = smul.addr %s177, 8
          %s179 = scalar_lea.vmem %s2, %s178
          %s180 = smul.u32 16, %s13
        $region32: #{tpu_custom_call.1} parent=19 // pred_fallthru
          _
      $region20: #{tpu_custom_call.1} parent=5 // pred_fallthru
        _
      %p181 = scmp.le.s32.totalorder 1, %s13
      %p182 = scmp.lt.s32.totalorder %s13, 3
      %p183 = pnand %p181, %p182
      %p184 = pneg %p183
      // Predicated region
      $region33: #{tpu_custom_call.1} parent=5 // pred_check
        _
      $region34: #{tpu_custom_call.1} parent=5 // pred_check_branch
        %186 = sbr.rel (%p183) target = $region36
      $region35: #{tpu_custom_call.1} parent=5 // pred_region
        %s187 = ssub.s32 %s13, 1
        %p188 = scmp.lt.s32.totalorder %s18, 1
        %s189 = scalar_select %p188, %s18, 1
        %s190 = scalar_lea.vmem %s0, %s189
        %p191 = pneg %p39
        %p192 = pneg %p36
        %p193 = scmp.lt.s32.totalorder %s18, 1
        %s194 = scalar_select %p193, %s18, 1
        %s195 = scalar_lea.vmem %s1, %s194
        %p196 = pneg %p65
        %p197 = pneg %p62
        %s198 = smul.u32 16, %s18
        %p199 = scmp.lt.s32.totalorder %s198, 31
        %s200 = scalar_select %p199, %s198, 31
        %s201 = smul.addr %s200, 8
        %s202 = scalar_lea.vmem %s2, %s201
        %p203 = pneg %p91
        %p204 = pneg %p88
        %p205 = pneg %p112
        %p206 = pneg %p109
        %p207 = pneg %p138
        %p208 = pneg %p135
        %s209 = sand.u32 %s125, 1
        %s210 = scalar_lea.sflag [#allocation3], %s209
        %s211 = sand.u32 %s125, 1
        %s212 = smul.addr %s211, 32
        %s213 = scalar_lea.vmem [#allocation2], %s212
        %p214 = scmp.lt.s32.totalorder %s18, 1
        %s215 = scalar_select %p214, %s18, 1
        %s216 = scalar_lea.vmem %s0, %s215
        %p217 = scmp.lt.s32.totalorder %s18, 1
        %s218 = scalar_select %p217, %s18, 1
        %s219 = scalar_lea.vmem %s1, %s218
        %s220 = smul.u32 16, %s18
        %p221 = scmp.lt.s32.totalorder %s220, 31
        %s222 = scalar_select %p221, %s220, 31
        %s223 = smul.addr %s222, 8
        %s224 = scalar_lea.vmem %s2, %s223
        %s225 = smul.u32 16, %s18
        %v226 = vld [vmem:[%s216] sm:$0x1]
        %v227 = vld [vmem:[%s219] sm:$0x1]
        %v228 = vld [vmem:[%s224] sm:$0xff]
        %v229 = vld [vmem:[%s224 + $0x8] sm:$0xff]
        %v230 = vld [vmem:[%s224 + $0x10] sm:$0xff]
        %v231 = vld [vmem:[%s224 + $0x18] sm:$0xff]
        %v232 = vld [vmem:[%s224 + $0x20] sm:$0xff]
        %v233 = vld [vmem:[%s224 + $0x28] sm:$0xff]
        %v234 = vld [vmem:[%s224 + $0x30] sm:$0xff]
        %v235 = vld [vmem:[%s224 + $0x38] sm:$0xff]
        %v236 = vld [vmem:[%s224 + $0x40] sm:$0xff]
        %v237 = vld [vmem:[%s224 + $0x48] sm:$0xff]
        %v238 = vld [vmem:[%s224 + $0x50] sm:$0xff]
        %v239 = vld [vmem:[%s224 + $0x58] sm:$0xff]
        %v240 = vld [vmem:[%s224 + $0x60] sm:$0xff]
        %v241 = vld [vmem:[%s224 + $0x68] sm:$0xff]
        %v242 = vld [vmem:[%s224 + $0x70] sm:$0xff]
        %v243 = vld [vmem:[%s224 + $0x78] sm:$0xff]
        %v244 = vld [vmem:[%s3] sm:$0xff]
        %v245 = vld [vmem:[%s3 + $0x8] sm:$0xff]
        %v246 = vld [vmem:[%s3 + $0x10] sm:$0xff]
        %v247 = vld [vmem:[%s3 + $0x18] sm:$0xff]
        %248 = vxpose.xlu0.b32.start [1/16] %v228, 128
        %249 = vxpose.xlu0.b32.cont [2/16] %v229, 128
        %250 = vxpose.xlu0.b32.cont [3/16] %v230, 128
        %251 = vxpose.xlu0.b32.cont [4/16] %v231, 128
        %252 = vxpose.xlu0.b32.cont [5/16] %v232, 128
        %253 = vxpose.xlu0.b32.cont [6/16] %v233, 128
        %254 = vxpose.xlu0.b32.cont [7/16] %v234, 128
        %255 = vxpose.xlu0.b32.cont [8/16] %v235, 128
        %256 = vxpose.xlu0.b32.cont [9/16] %v236, 128
        %257 = vxpose.xlu0.b32.cont [10/16] %v237, 128
        %258 = vxpose.xlu0.b32.cont [11/16] %v238, 128
        %259 = vxpose.xlu0.b32.cont [12/16] %v239, 128
        %260 = vxpose.xlu0.b32.cont [13/16] %v240, 128
        %261 = vxpose.xlu0.b32.cont [14/16] %v241, 128
        %262 = vxpose.xlu0.b32.cont [15/16] %v242, 128
        %263 = vxpose.xlu0.b32.end [16/16] %v243, 128
        %v264 = vpop.trf.xlu0
        %v265 = vpop.trf.xlu0
        %v266 = vpop.trf.xlu0
        %v267 = vpop.trf.xlu0
        %v268 = vpop.trf.xlu0
        %v269 = vpop.trf.xlu0
        %v270 = vpop.trf.xlu0
        %v271 = vpop.trf.xlu0
        %v272 = vpop.trf.xlu0
        %v273 = vpop.trf.xlu0
        %v274 = vpop.trf.xlu0
        %v275 = vpop.trf.xlu0
        %v276 = vpop.trf.xlu0
        %v277 = vpop.trf.xlu0
        %v278 = vpop.trf.xlu0
        %v279 = vpop.trf.xlu0
        %v280 = vlaneseq
        %v281 = vshrl.u32 %v280, 7
        %v282 = vadd.s32 %v281, 8
        %v283 = vadd.s32 %v281, 16
        %v284 = vadd.s32 %v281, 24
        %v285 = vperm.slane %v226, 0
        %vm286 = vcmp.eq.s32.totalorder %v281, %v285
        %vm287 = vcmp.eq.s32.totalorder %v282, %v285
        %vm288 = vcmp.eq.s32.totalorder %v283, %v285
        %vm289 = vcmp.eq.s32.totalorder %v284, %v285
        %v290 = vperm.slane %v227, 0
        %vm291 = vcmp.eq.s32.totalorder %v281, %v290
        %vm292 = vcmp.eq.s32.totalorder %v282, %v290
        %vm293 = vcmp.eq.s32.totalorder %v283, %v290
        %vm294 = vcmp.eq.s32.totalorder %v284, %v290
        %vm295 = vmor %vm286, %vm291
        %vm296 = vmor %vm287, %vm292
        %vm297 = vmor %vm288, %vm293
        %vm298 = vmor %vm289, %vm294
        %v299 = vsel %vm295, 1, 0
        %v300 = vsel %vm296, 1, 0
        %v301 = vsel %vm297, 1, 0
        %v302 = vsel %vm298, 1, 0
        %v303 = vcvt.s32.f32 %v299
        %v304 = vcvt.s32.f32 %v300
        %v305 = vcvt.s32.f32 %v301
        %v306 = vcvt.s32.f32 %v302
        %vm307 = vcmask 523264
        %v309 = vsel %vm307, %v244, 0
        %v312 = vsel %vm307, %v245, 0
        %v315 = vsel %vm307, %v246, 0
        %v318 = vsel %vm307, %v247, 0
        %320 = vmatpush.msra.mxu0 0.0
        %321 = vmatpush.msra.mxu0 0.0
        %322 = vmatpush.msra.mxu0 0.0
        %323 = vmatpush.msra.mxu0 0.0
        %324 = vmatpush.msra.mxu0 0.0
        %325 = vmatpush.msra.mxu0 0.0
        %326 = vmatpush.msra.mxu0 0.0
        %327 = vmatpush.msra.mxu0 0.0
        %328 = vmatpush.msra.mxu0 %v306
        %329 = vmatpush.msra.mxu0 %v305
        %330 = vmatpush.msra.mxu0 %v304
        %331 = vmatpush.msra.mxu0 %v303
        %332 = vmatpush.msra.mxu0 %v267
        %333 = vmatpush.msra.mxu0 %v266
        %334 = vmatpush.msra.mxu0 %v265
        %335 = vmatpush.msra.mxu0 %v264
        %336 = vmatmul.f32.gmra.mxu0 %v309
        %v337 = vpop.f32.mrf.mxu0
        %v338 = vadd.f32 0.0, %v337
        %339 = vmatmul.f32.gmra.mxu0 %v312
        %v340 = vpop.f32.mrf.mxu0
        %v341 = vadd.f32 0.0, %v340
        %342 = vmatmul.f32.gmra.mxu0 %v315
        %v343 = vpop.f32.mrf.mxu0
        %v344 = vadd.f32 0.0, %v343
        %345 = vmatmul.f32.gmra.mxu0 %v318
        %v346 = vpop.f32.mrf.mxu0
        %v347 = vadd.f32 0.0, %v346
        %348 = vdwg.mxu0
        %349 = vst [vmem:[%s213] sm:$0xff] %v338
        %350 = vst [vmem:[%s213 + $0x8] sm:$0xff] %v341
        %351 = vst [vmem:[%s213 + $0x10] sm:$0xff] %v344
        %352 = vst [vmem:[%s213 + $0x18] sm:$0xff] %v347
        %s353 = sand.u32 %s125, 1
        %s354 = scalar_lea.sflag [#allocation3], %s353
        %s355 = sand.u32 %s125, 1
        %s356 = smul.addr %s355, 32
        %s357 = scalar_lea.vmem [#allocation2], %s356
        // Predicated region
        $region37: #{tpu_custom_call.1} parent=35 // pred_check
          %p358 = pneg %p135
        $region38: #{tpu_custom_call.1} parent=35 // pred_check_branch
          %360 = sbr.rel (%p358) target = $region40
        $region39: #{tpu_custom_call.1} parent=35 // pred_region
          %362 = vsyncadd %s354, 0
          %s363 = smul.addr %s18, 8
          %s364 = scalar_lea.hbm %s4, %s363
          %s365 = sshll.u32 %s357, 4
          %s366 = int_to_ptr.vmem [resolvable:$true] %s365
          %s367 = sshll.u32 %s364, 4
          %s368 = int_to_ptr.hbm [resolvable:$true] %s367
          %373 = dma.vmem_to_hbm [thread:$0]  %s366, 512, %s368, %s354, 128, 256, 8
        $region40: #{tpu_custom_call.1} parent=35 // pred_fallthru
          _
      $region36: #{tpu_custom_call.1} parent=5 // pred_fallthru
        _
      %p374 = scmp.le.s32.totalorder 2, %s13
      // Predicated region
      $region41: #{tpu_custom_call.1} parent=5 // pred_check
        %p375 = pneg %p374
      $region42: #{tpu_custom_call.1} parent=5 // pred_check_branch
        %377 = sbr.rel (%p375) target = $region44
      $region43: #{tpu_custom_call.1} parent=5 // pred_region
        %s378 = ssub.s32 %s13, 2
        // Predicated region
        $region45: #{tpu_custom_call.1} parent=43 // pred_check
          %p379 = pneg %p141
        $region46: #{tpu_custom_call.1} parent=43 // pred_check_branch
          %381 = sbr.rel (%p379) target = $region48
        $region47: #{tpu_custom_call.1} parent=43 // pred_region
          %s382 = sand.u32 %s126, 1
          %s383 = scalar_lea.sflag [#allocation3], %s382
          %s384 = sand.u32 %s126, 1
          %s385 = smul.addr %s384, 32
          %s386 = scalar_lea.vmem [#allocation2], %s385
          %388 = dma.done %s383, 512
        $region48: #{tpu_custom_call.1} parent=43 // pred_fallthru
          _
      $region44: #{tpu_custom_call.1} parent=5 // pred_fallthru
        _
    $region6: #{tpu_custom_call.1} parent=1 // loop_footer
      %s17 = sadd.s32 1, %s13
    $region7: #{tpu_custom_call.1} parent=1 // loop_footer_branch
      %12 = sbr.rel target = $region3
    $region8: #{tpu_custom_call.1} parent=1 // loop_exit
      _
    %389 = vsyncpa [#allocation3], 1
    %s390 = scalar_lea.sflag [#allocation3], 1
    %391 = vsyncpa %s390, 1

</llo_original>
